<compile_context>
chip_gen: v5e
topology: v5e:2x2
jax: 0.10.0
libtpu: 0.0.40
codegen_flags: <defaults>
</compile_context>

<pallas_src>
import jax
import jax.numpy as jnp
from jax.experimental import pallas as pl
from jax.experimental.pallas import tpu as pltpu


def _make_ce_kernel(num_classes: int, ts: int, hw: int, needs_mask: bool):
    def ce_kernel(logits_ref, tgt_ref, out_ref):
        # Per-channel f32 views, each (TS, 128).  Channel axis is fully unrolled
        # (small C): all reductions below are plain full-vreg VPU ops.
        xs = [logits_ref[0, c].astype(jnp.float32) for c in range(num_classes)]
        t = tgt_ref[0, 0].astype(jnp.int32)                    # (TS, 128)

        # numerically stable logsumexp over channels
        m = xs[0]
        for c in range(1, num_classes):
            m = jnp.maximum(m, xs[c])
        s = jnp.exp(xs[0] - m)
        for c in range(1, num_classes):
            s = s + jnp.exp(xs[c] - m)
        lse = m + jnp.log(s)                                   # (TS, 128)

        # gather logit at target class via unrolled per-channel select
        picked = jnp.where(t == 0, xs[0], 0.0)
        for c in range(1, num_classes):
            picked = jnp.where(t == c, xs[c], picked)

        loss = lse - picked                                    # (TS, 128)

        if needs_mask:
            j = pl.program_id(1)
            s_idx = jax.lax.broadcasted_iota(jnp.int32, (ts, 128), 0)
            l_idx = jax.lax.broadcasted_iota(jnp.int32, (ts, 128), 1)
            pix = (j * ts + s_idx) * 128 + l_idx               # flat pixel index
            loss = jnp.where(pix < hw, loss, 0.0)              # true select: no NaN leak

        # per-tile scalar partial; summed (cheaply) outside the kernel
        out_ref[0, 0] = jnp.sum(loss, keepdims=True)           # (1, 1)

    return ce_kernel


def _choose_tile_ts(hw128: int, c: int, target_f32_bytes: int = 6 << 20) -> int:
    """Rows of 128 pixels per tile, sized so the f32 working block is ~6 MiB.

    6 MiB keeps double-buffered inputs + f32 temporaries well inside v7x's
    64 MiB VMEM while still being >10x the per-step pipeline overhead at the
    HBM roofline on v5e/v6e/v7x.
    """
    max_ts = max(8, target_f32_bytes // (c * 128 * 4))
    if hw128 <= max_ts:
        return hw128                      # full extent: always a legal block dim
    return max(8, (max_ts // 8) * 8)      # partial tile: keep sublane-aligned


def cross_entropy_loss_2d(inputs_nchw, targets_nhw, *, tile_ts=None):
    """inputs_nchw: (N, C, H, W) float logits; targets_nhw: (N, H, W) int class ids."""
    N, C, H, W = inputs_nchw.shape
    HW = H * W
    P = N * HW

    # free reshapes only (plus a pad pass iff H*W is not a multiple of 128)
    HWp = ((HW + 127) // 128) * 128
    logits = inputs_nchw.reshape(N, C, HW)
    tgt = targets_nhw.reshape(N, 1, HW)            # keep native dtype; widen in-kernel
    if HWp != HW:
        logits = jnp.pad(logits, ((0, 0), (0, 0), (0, HWp - HW)))
        tgt = jnp.pad(tgt, ((0, 0), (0, 0), (0, HWp - HW)))
    HW128 = HWp // 128
    logits = logits.reshape(N, C, HW128, 128)
    tgt = tgt.reshape(N, 1, HW128, 128)

    if tile_ts is None:
        ts = _choose_tile_ts(HW128, C, 6 << 20)
    else:
        ts = min(int(tile_ts), HW128)
        if ts < HW128:
            ts = max(8, (ts // 8) * 8)
    num_j = pl.cdiv(HW128, ts)
    needs_mask = (HWp != HW) or (HW128 % ts != 0)

    kernel = _make_ce_kernel(C, ts, HW, needs_mask)

    # VMEM budget: double-buffered input blocks + per-channel f32 upcasts +
    # a handful of (TS,128) f32 elementwise temporaries + margin.
    lg_item = logits.dtype.itemsize
    tg_item = tgt.dtype.itemsize
    in_block = C * ts * 128 * lg_item
    tgt_block = ts * 128 * tg_item
    f32_block = C * ts * 128 * 4
    temps = f32_block + 8 * ts * 128 * 4
    needed = 2 * (in_block + tgt_block) + temps + (2 << 20)
    # >= v5e's 16 MiB scoped default; with the 6 MiB block cap this stays well
    # under v7x's 64 MiB physical VMEM.
    vmem_limit = int(max(needed, 32 << 20))

    cost = pl.CostEstimate(
        flops=int(6 * P * C),
        transcendentals=int(P * (C + 1)),
        bytes_accessed=int(logits.size * lg_item + tgt.size * tg_item + N * num_j * 4),
    )

    partials = pl.pallas_call(
        kernel,
        out_shape=jax.ShapeDtypeStruct((N, num_j, 1, 1), jnp.float32),
        grid_spec=pltpu.PrefetchScalarGridSpec(
            num_scalar_prefetch=0,
            grid=(N, num_j),
            in_specs=[
                pl.BlockSpec((1, C, ts, 128), lambda n, j: (n, 0, j, 0)),
                pl.BlockSpec((1, 1, ts, 128), lambda n, j: (n, 0, j, 0)),
            ],
            out_specs=pl.BlockSpec((1, 1, 1, 1), lambda n, j: (n, j, 0, 0)),
        ),
        compiler_params=pltpu.CompilerParams(
            dimension_semantics=("parallel", "parallel"),
            vmem_limit_bytes=vmem_limit,
        ),
        cost_estimate=cost,
    )(logits, tgt)

    # size_average=True, no weights -> mean over all N*H*W pixels
    return jnp.sum(partials) / P


def _reference(inputs_nchw, targets_nhw):
    # pure-JAX reference: F.log_softmax(inputs, 1) + NLLLoss2d(mean)
    logp = jax.nn.log_softmax(inputs_nchw.astype(jnp.float32), axis=1)
    N, C, H, W = inputs_nchw.shape
    logp_nhwc = jnp.transpose(logp, (0, 2, 3, 1)).reshape(-1, C)
    t = targets_nhw.reshape(-1)
    picked = jnp.take_along_axis(logp_nhwc, t[:, None], axis=1)[:, 0]
    return -jnp.mean(picked)


if __name__ == "__main__":
    key = jax.random.PRNGKey(0)
    k1, k2, k3, k4, k5, k6 = jax.random.split(key, 6)

    # primary test: N=2, C=4, H=W=16 (HW=256, exact lane multiple, no mask)
    N, C, H, W = 2, 4, 16, 16
    inputs = jax.random.normal(k1, (N, C, H, W), dtype=jnp.float32)
    targets = jax.random.randint(k2, (N, H, W), 0, C, dtype=jnp.int32)

    loss = jax.block_until_ready(cross_entropy_loss_2d(inputs, targets))
    ref = jax.block_until_ready(_reference(inputs, targets))
    assert jnp.allclose(loss, ref, atol=1e-5, rtol=1e-5), (loss, ref)

    # padded path: HW=400 -> padded to 512, exercises the validity mask
    N2, C2, H2, W2 = 2, 4, 20, 20
    inputs2 = jax.random.normal(k3, (N2, C2, H2, W2), dtype=jnp.float32)
    targets2 = jax.random.randint(k4, (N2, H2, W2), 0, C2, dtype=jnp.int32)

    loss2 = jax.block_until_ready(cross_entropy_loss_2d(inputs2, targets2))
    ref2 = jax.block_until_ready(_reference(inputs2, targets2))
    assert jnp.allclose(loss2, ref2, atol=1e-5, rtol=1e-5), (loss2, ref2)

    # multi-tile ragged path: N=1, C=3, HW=1296 -> 11 rows of 128, tile_ts=8
    # (ragged last sublane tile + pad mask, both grid axes parallel at N=1)
    N3, C3, H3, W3 = 1, 3, 36, 36
    inputs3 = jax.random.normal(k5, (N3, C3, H3, W3), dtype=jnp.float32)
    targets3 = jax.random.randint(k6, (N3, H3, W3), 0, C3, dtype=jnp.int32)

    loss3 = jax.block_until_ready(cross_entropy_loss_2d(inputs3, targets3, tile_ts=8))
    ref3 = jax.block_until_ready(_reference(inputs3, targets3))
    assert jnp.allclose(loss3, ref3, atol=1e-5, rtol=1e-5), (loss3, ref3)

    print("KERNEL_OK")
</pallas_src>

<mosaic_0001>
module attributes {stable_mosaic.version = 11 : i64} {
  func.func @ce_kernel(%arg0: i32, %arg1: i32, %arg2: memref<1x4x2x128xf32, #tpu.memory_space<vmem>>, %arg3: memref<1x1x2x128xi32, #tpu.memory_space<vmem>>, %arg4: memref<1x1x1x1xf32, #tpu.memory_space<vmem>>) attributes {dimension_semantics = [#tpu.dimension_semantics<parallel>, #tpu.dimension_semantics<parallel>], iteration_bounds = array<i64: 2, 1>, scalar_prefetch = 0 : i64, scratch_operands = 0 : i64, tpu.core_type = #tpu.core_type<tc>, window_params = [{transform_indices = @transform_0, window_bounds = array<i64: 1, 4, 2, 128>}, {transform_indices = @transform_1, window_bounds = array<i64: 1, 1, 2, 128>}, {transform_indices = @transform_2, window_bounds = array<i64: 1, 1, 1, 1>}]} {
    %c0 = arith.constant 0 : index
    %c0_0 = arith.constant 0 : index
    %c0_1 = arith.constant 0 : index
    %c0_2 = arith.constant 0 : index
    %0 = vector.load %arg2[%c0, %c0_0, %c0_1, %c0_2] : memref<1x4x2x128xf32, #tpu.memory_space<vmem>>, vector<1x1x2x128xf32>
    %1 = vector.shape_cast %0 : vector<1x1x2x128xf32> to vector<2x128xf32>
    %c0_3 = arith.constant 0 : index
    %c1 = arith.constant 1 : index
    %c0_4 = arith.constant 0 : index
    %c0_5 = arith.constant 0 : index
    %2 = vector.load %arg2[%c0_3, %c1, %c0_4, %c0_5] : memref<1x4x2x128xf32, #tpu.memory_space<vmem>>, vector<1x1x2x128xf32>
    %3 = vector.shape_cast %2 : vector<1x1x2x128xf32> to vector<2x128xf32>
    %c0_6 = arith.constant 0 : index
    %c2 = arith.constant 2 : index
    %c0_7 = arith.constant 0 : index
    %c0_8 = arith.constant 0 : index
    %4 = vector.load %arg2[%c0_6, %c2, %c0_7, %c0_8] : memref<1x4x2x128xf32, #tpu.memory_space<vmem>>, vector<1x1x2x128xf32>
    %5 = vector.shape_cast %4 : vector<1x1x2x128xf32> to vector<2x128xf32>
    %c0_9 = arith.constant 0 : index
    %c3 = arith.constant 3 : index
    %c0_10 = arith.constant 0 : index
    %c0_11 = arith.constant 0 : index
    %6 = vector.load %arg2[%c0_9, %c3, %c0_10, %c0_11] : memref<1x4x2x128xf32, #tpu.memory_space<vmem>>, vector<1x1x2x128xf32>
    %7 = vector.shape_cast %6 : vector<1x1x2x128xf32> to vector<2x128xf32>
    %c0_12 = arith.constant 0 : index
    %c0_13 = arith.constant 0 : index
    %c0_14 = arith.constant 0 : index
    %c0_15 = arith.constant 0 : index
    %8 = vector.load %arg3[%c0_12, %c0_13, %c0_14, %c0_15] : memref<1x1x2x128xi32, #tpu.memory_space<vmem>>, vector<1x1x2x128xi32>
    %9 = vector.shape_cast %8 : vector<1x1x2x128xi32> to vector<2x128xi32>
    %10 = arith.maximumf %1, %3 : vector<2x128xf32>
    %11 = arith.maximumf %10, %5 : vector<2x128xf32>
    %12 = arith.maximumf %11, %7 : vector<2x128xf32>
    %13 = arith.subf %1, %12 : vector<2x128xf32>
    %14 = math.exp %13 : vector<2x128xf32>
    %15 = arith.subf %3, %12 : vector<2x128xf32>
    %16 = math.exp %15 : vector<2x128xf32>
    %17 = arith.addf %14, %16 : vector<2x128xf32>
    %18 = arith.subf %5, %12 : vector<2x128xf32>
    %19 = math.exp %18 : vector<2x128xf32>
    %20 = arith.addf %17, %19 : vector<2x128xf32>
    %21 = arith.subf %7, %12 : vector<2x128xf32>
    %22 = math.exp %21 : vector<2x128xf32>
    %23 = arith.addf %20, %22 : vector<2x128xf32>
    %24 = math.log %23 : vector<2x128xf32>
    %25 = arith.addf %12, %24 : vector<2x128xf32>
    %c0_i32 = arith.constant 0 : i32
    %26 = vector.broadcast %c0_i32 : i32 to vector<2x128xi32>
    %27 = arith.cmpi eq, %9, %26 : vector<2x128xi32>
    %cst = arith.constant 0.000000e+00 : f32
    %28 = vector.broadcast %cst : f32 to vector<2x128xf32>
    %29 = arith.select %27, %1, %28 : vector<2x128xi1>, vector<2x128xf32>
    %c1_i32 = arith.constant 1 : i32
    %30 = vector.broadcast %c1_i32 : i32 to vector<2x128xi32>
    %31 = arith.cmpi eq, %9, %30 : vector<2x128xi32>
    %32 = arith.select %31, %3, %29 : vector<2x128xi1>, vector<2x128xf32>
    %c2_i32 = arith.constant 2 : i32
    %33 = vector.broadcast %c2_i32 : i32 to vector<2x128xi32>
    %34 = arith.cmpi eq, %9, %33 : vector<2x128xi32>
    %35 = arith.select %34, %5, %32 : vector<2x128xi1>, vector<2x128xf32>
    %c3_i32 = arith.constant 3 : i32
    %36 = vector.broadcast %c3_i32 : i32 to vector<2x128xi32>
    %37 = arith.cmpi eq, %9, %36 : vector<2x128xi32>
    %38 = arith.select %37, %7, %35 : vector<2x128xi1>, vector<2x128xf32>
    %39 = arith.subf %25, %38 : vector<2x128xf32>
    %40 = vector.shape_cast %39 : vector<2x128xf32> to vector<1x2x128xf32>
    %cst_16 = arith.constant dense<0.000000e+00> : vector<1xf32>
    %41 = vector.multi_reduction <add>, %40, %cst_16 [1, 2] : vector<1x2x128xf32> to vector<1xf32>
    %42 = vector.shape_cast %41 : vector<1xf32> to vector<1x1x1xf32>
    %43 = vector.extract %42[0, 0, 0] : f32 from vector<1x1x1xf32>
    %44 = vector.broadcast %43 : f32 to vector<1x1xf32>
    %c0_17 = arith.constant 0 : index
    %c0_18 = arith.constant 0 : index
    %c0_19 = arith.constant 0 : index
    %c0_20 = arith.constant 0 : index
    %45 = vector.load %arg4[%c0_17, %c0_18, %c0_19, %c0_20] : memref<1x1x1x1xf32, #tpu.memory_space<vmem>>, vector<1x1x1x1xf32>
    %46 = vector.shape_cast %45 : vector<1x1x1x1xf32> to vector<1x1xf32>
    %47 = vector.shape_cast %44 : vector<1x1xf32> to vector<1x1x1x1xf32>
    tpu.vector_store %arg4[%c0_17, %c0_18, %c0_19, %c0_20], %47 {strides = array<i32>} : memref<1x1x1x1xf32, #tpu.memory_space<vmem>>, vector<1x1x1x1xf32>,
    return
  }
  func.func @transform_0(%arg0: i32, %arg1: i32) -> (i32, i32, i32, i32) {
    %c0_i32 = arith.constant 0 : i32
    %c0_i32_0 = arith.constant 0 : i32
    %c0_i32_1 = arith.constant 0 : i32
    return %arg0, %c0_i32, %arg1, %c0_i32_0 : i32, i32, i32, i32
  }
  func.func @transform_1(%arg0: i32, %arg1: i32) -> (i32, i32, i32, i32) {
    %c0_i32 = arith.constant 0 : i32
    %c0_i32_0 = arith.constant 0 : i32
    %c0_i32_1 = arith.constant 0 : i32
    return %arg0, %c0_i32, %arg1, %c0_i32_0 : i32, i32, i32, i32
  }
  func.func @transform_2(%arg0: i32, %arg1: i32) -> (i32, i32, i32, i32) {
    %c0_i32 = arith.constant 0 : i32
    %c0_i32_0 = arith.constant 0 : i32
    %c0_i32_1 = arith.constant 0 : i32
    return %arg0, %arg1, %c0_i32, %c0_i32_0 : i32, i32, i32, i32
  }
}

</mosaic_0001>

<llo_original>
// kernel: tpu_custom_call.1
$region0: #{tpu_custom_call.1}
  #allocation0 [shape = 'u32[]', space=smem, size = 0x4, offset = 0x4, fixed_abs, tag = 'smem constant byte address 0x4 - core index']
  #allocation1 [shape = 'u32[72,128]{1,0:T(1,128)}', space=vmem, size = 0x9000, scoped, tag = 'internal scratch']
  %s0 = inlined_call_operand.hbm [shape: f32[2,4,2,128], index: 0, kind: input, shape index: {}]
  %s1 = inlined_call_operand.hbm [shape: s32[2,1,2,128], index: 1, kind: input, shape index: {}]
  %s2 = inlined_call_operand.vmem [shape: f32[2,1,1,1], index: 2, kind: output, shape index: {}]
  %s3 = sld [smem:[#allocation0]]
  $region49: #{tpu_custom_call.1} parent=0
    _
  %s5 = ssub.s32 1, %s3
  %s6 = scalar_select 0, %s5, %s3
  $region1: #{tpu_custom_call.1} parent=0
    #allocation2 [shape = 'u8[8192]{0}', space=vmem, size = 0x2000, scoped, tag = 'input window, operand 0']
    #allocation3 [shape = 's32[2]{0}', space=sflag, size = 0x8, scoped, tag = 'scoped memory for tpu_custom_call.1']
    #allocation4 [shape = 'u8[2048]{0}', space=vmem, size = 0x800, scoped, tag = 'input window, operand 1']
    #allocation5 [shape = 's32[2]{0}', space=sflag, size = 0x8, scoped, tag = 'scoped memory for tpu_custom_call.1']
    %7 = vsyncpa [#allocation3], 0
    %s8 = scalar_lea.sflag [#allocation3], 1
    %9 = vsyncpa %s8, 0
    %10 = vsyncpa [#allocation5], 0
    %s11 = scalar_lea.sflag [#allocation5], 1
    %12 = vsyncpa %s11, 0
    loop: start=0, step=1, limit=4
    $region2: #{tpu_custom_call.1} parent=1 // loop_pre_header
      _
    $region3: #{tpu_custom_call.1} parent=1 // loop_header
      %s14 = sphi 0, %s18
      %p15 = scmp.ge.s32.totalorder %s14, 4
      %s21 = sphi 0, %s33
      %s22 = sphi 0, %s29
      %s23 = sphi 0, %s21
      %s24 = sphi 0, %s22
      %s25 = sphi 0, %s23
      %s26 = sphi 0, %s24
      %s38 = sphi 0, %s40
      %s41 = sphi 0, %s38
      %s42 = sphi 0, %s41
      %s58 = sphi 0, %s42
      %s66 = sphi 0, %s68
      %s69 = sphi 0, %s66
      %s70 = sphi 0, %s69
      %s86 = sphi 0, %s70
      %s94 = sphi 0, %s96
      %s97 = sphi 0, %s94
      %s98 = sphi 0, %s97
      %s114 = sphi 0, %s98
    $region4: #{tpu_custom_call.1} parent=1 // loop_header_branch
      %17 = sbr.rel (%p15) target = $region8
    $region5: #{tpu_custom_call.1} parent=1 // loop_body
      %s19 = ssub.s32 %s14, 1
      %s20 = ssub.s32 %s14, 2
      %s27 = sadd.s32 1, %s22
      %p28 = scmp.ge.s32.totalorder %s27, 1
      %s29 = scalar_select %p28, 0, %s27
      %s30 = sadd.s32 1, %s21
      %s31 = scalar_select %p28, %s30, %s21
      %p32 = scmp.ge.s32.totalorder %s31, 2
      %s33 = scalar_select %p32, 0, %s31
      %s34 = ssub.s32 %s21, %s33
      %s35 = ssub.s32 %s22, %s29
      %s36 = sor.u32 %s34, %s35
      %p37 = scmp.eq.s32.totalorder %s36, 0
      %s39 = sadd.s32 %s38, 1
      %s40 = scalar_select %p37, %s38, %s39
      %p43 = pneg %p37
      %p44 = scmp.eq.s32.totalorder %s14, 1
      %p45 = por %p43, %p44
      %p46 = scmp.ne.s32.totalorder %s38, %s41
      %p47 = scmp.eq.s32.totalorder %s14, 0
      %p48 = por %p46, %p47
      %p49 = scmp.ne.s32.totalorder %s38, %s41
      %p50 = scmp.eq.s32.totalorder %s19, 1
      %p51 = por %p49, %p50
      %p52 = scmp.ne.s32.totalorder %s41, %s42
      %p53 = scmp.eq.s32.totalorder %s19, 0
      %p54 = por %p52, %p53
      %p55 = scmp.ne.s32.totalorder %s41, %s42
      %p56 = scmp.eq.s32.totalorder %s20, 1
      %p57 = por %p55, %p56
      %p59 = scmp.ne.s32.totalorder %s42, %s58
      %p60 = scmp.eq.s32.totalorder %s20, 0
      %p61 = por %p59, %p60
      %s62 = ssub.s32 %s21, %s33
      %s63 = ssub.s32 %s22, %s29
      %s64 = sor.u32 %s62, %s63
      %p65 = scmp.eq.s32.totalorder %s64, 0
      %s67 = sadd.s32 %s66, 1
      %s68 = scalar_select %p65, %s66, %s67
      %p71 = pneg %p65
      %p72 = scmp.eq.s32.totalorder %s14, 1
      %p73 = por %p71, %p72
      %p74 = scmp.ne.s32.totalorder %s66, %s69
      %p75 = scmp.eq.s32.totalorder %s14, 0
      %p76 = por %p74, %p75
      %p77 = scmp.ne.s32.totalorder %s66, %s69
      %p78 = scmp.eq.s32.totalorder %s19, 1
      %p79 = por %p77, %p78
      %p80 = scmp.ne.s32.totalorder %s69, %s70
      %p81 = scmp.eq.s32.totalorder %s19, 0
      %p82 = por %p80, %p81
      %p83 = scmp.ne.s32.totalorder %s69, %s70
      %p84 = scmp.eq.s32.totalorder %s20, 1
      %p85 = por %p83, %p84
      %p87 = scmp.ne.s32.totalorder %s70, %s86
      %p88 = scmp.eq.s32.totalorder %s20, 0
      %p89 = por %p87, %p88
      %s90 = ssub.s32 %s21, %s33
      %s91 = ssub.s32 %s22, %s29
      %s92 = sor.u32 %s90, %s91
      %p93 = scmp.eq.s32.totalorder %s92, 0
      %s95 = sadd.s32 %s94, 1
      %s96 = scalar_select %p93, %s94, %s95
      %p99 = pneg %p93
      %p100 = scmp.eq.s32.totalorder %s14, 1
      %p101 = por %p99, %p100
      %p102 = scmp.ne.s32.totalorder %s94, %s97
      %p103 = scmp.eq.s32.totalorder %s14, 0
      %p104 = por %p102, %p103
      %p105 = scmp.ne.s32.totalorder %s94, %s97
      %p106 = scmp.eq.s32.totalorder %s19, 1
      %p107 = por %p105, %p106
      %p108 = scmp.ne.s32.totalorder %s97, %s98
      %p109 = scmp.eq.s32.totalorder %s19, 0
      %p110 = por %p108, %p109
      %p111 = scmp.ne.s32.totalorder %s97, %s98
      %p112 = scmp.eq.s32.totalorder %s20, 1
      %p113 = por %p111, %p112
      %p115 = scmp.ne.s32.totalorder %s98, %s114
      %p116 = scmp.eq.s32.totalorder %s20, 0
      %p117 = por %p115, %p116
      %p118 = scmp.le.s32.totalorder 1, %s14
      %p119 = scmp.lt.s32.totalorder %s14, 3
      %p120 = pnand %p118, %p119
      %p121 = pneg %p120
      // Predicated region
      $region9: #{tpu_custom_call.1} parent=5 // pred_check
        _
      $region10: #{tpu_custom_call.1} parent=5 // pred_check_branch
        %123 = sbr.rel (%p120) target = $region12
      $region11: #{tpu_custom_call.1} parent=5 // pred_region
        %s124 = ssub.s32 %s14, 1
      $region12: #{tpu_custom_call.1} parent=5 // pred_fallthru
        _
      %p125 = scmp.lt.s32.totalorder %s14, 2
      // Predicated region
      $region13: #{tpu_custom_call.1} parent=5 // pred_check
        %p126 = pneg %p125
      $region14: #{tpu_custom_call.1} parent=5 // pred_check_branch
        %128 = sbr.rel (%p126) target = $region16
      $region15: #{tpu_custom_call.1} parent=5 // pred_region
        // Predicated region
        $region17: #{tpu_custom_call.1} parent=15 // pred_check
          %p129 = pneg %p48
        $region18: #{tpu_custom_call.1} parent=15 // pred_check_branch
          %131 = sbr.rel (%p129) target = $region20
        $region19: #{tpu_custom_call.1} parent=15 // pred_region
          %s132 = sand.u32 %s38, 1
          %s133 = scalar_lea.sflag [#allocation3], %s132
          %s134 = sand.u32 %s38, 1
          %s135 = smul.addr %s134, 8
          %s136 = scalar_lea.vmem [#allocation2], %s135
          %138 = vsyncadd %s133, 0
          %s139 = smul.addr %s21, 4
          %s140 = sadd.s32 %s22, %s139
          %s141 = smul.addr %s140, 2
          %s142 = scalar_lea.hbm %s0, %s141
          %s143 = sshll.u32 %s142, 4
          %s144 = int_to_ptr.hbm [resolvable:$true] %s143
          %s145 = sshll.u32 %s136, 4
          %s146 = int_to_ptr.vmem [resolvable:$true] %s145
          %151 = dma.hbm_to_vmem [thread:$0]  %s144, 128, %s146, %s133, 32, 32, 2
        $region20: #{tpu_custom_call.1} parent=15 // pred_fallthru
          _
        // Predicated region
        $region21: #{tpu_custom_call.1} parent=15 // pred_check
          %p152 = pneg %p76
        $region22: #{tpu_custom_call.1} parent=15 // pred_check_branch
          %154 = sbr.rel (%p152) target = $region24
        $region23: #{tpu_custom_call.1} parent=15 // pred_region
          %s155 = sand.u32 %s66, 1
          %s156 = scalar_lea.sflag [#allocation5], %s155
          %s157 = sand.u32 %s66, 1
          %s158 = smul.addr %s157, 2
          %s159 = scalar_lea.vmem [#allocation4], %s158
          %161 = vsyncadd %s156, 0
          %s162 = sadd.s32 %s22, %s21
          %s163 = smul.addr %s162, 2
          %s164 = scalar_lea.hbm %s1, %s163
          %s166 = sshll.u32 %s164, 4
          %s167 = int_to_ptr.hbm [resolvable:$true] %s166
          %s168 = sshll.u32 %s159, 4
          %s169 = int_to_ptr.vmem [resolvable:$true] %s168
          %171 = dma.hbm_to_vmem [thread:$0]  %s167, 32, %s169, %s156
        $region24: #{tpu_custom_call.1} parent=15 // pred_fallthru
          _
      $region16: #{tpu_custom_call.1} parent=5 // pred_fallthru
        _
      %p172 = scmp.le.s32.totalorder 1, %s14
      %p173 = scmp.lt.s32.totalorder %s14, 3
      %p174 = pnand %p172, %p173
      %p175 = pneg %p174
      // Predicated region
      $region25: #{tpu_custom_call.1} parent=5 // pred_check
        _
      $region26: #{tpu_custom_call.1} parent=5 // pred_check_branch
        %177 = sbr.rel (%p174) target = $region28
      $region27: #{tpu_custom_call.1} parent=5 // pred_region
        %s178 = ssub.s32 %s14, 1
        %s179 = sand.u32 %s41, 1
        %s180 = scalar_lea.sflag [#allocation3], %s179
        %s181 = sand.u32 %s41, 1
        %s182 = smul.addr %s181, 8
        %s183 = scalar_lea.vmem [#allocation2], %s182
        // Predicated region
        $region29: #{tpu_custom_call.1} parent=27 // pred_check
          %p184 = pneg %p54
        $region30: #{tpu_custom_call.1} parent=27 // pred_check_branch
          %186 = sbr.rel (%p184) target = $region32
        $region31: #{tpu_custom_call.1} parent=27 // pred_region
          %188 = dma.done %s180, 128
        $region32: #{tpu_custom_call.1} parent=27 // pred_fallthru
          _
        %s189 = sand.u32 %s69, 1
        %s190 = scalar_lea.sflag [#allocation5], %s189
        %s191 = sand.u32 %s69, 1
        %s192 = smul.addr %s191, 2
        %s193 = scalar_lea.vmem [#allocation4], %s192
        // Predicated region
        $region33: #{tpu_custom_call.1} parent=27 // pred_check
          %p194 = pneg %p82
        $region34: #{tpu_custom_call.1} parent=27 // pred_check_branch
          %196 = sbr.rel (%p194) target = $region36
        $region35: #{tpu_custom_call.1} parent=27 // pred_region
          %198 = dma.done %s190, 32
        $region36: #{tpu_custom_call.1} parent=27 // pred_fallthru
          _
        %s199 = sand.u32 %s41, 1
        %s200 = scalar_lea.sflag [#allocation3], %s199
        %s201 = sand.u32 %s41, 1
        %s202 = smul.addr %s201, 8
        %s203 = scalar_lea.vmem [#allocation2], %s202
        %p204 = pneg %p54
        %p205 = pneg %p51
        %s206 = sand.u32 %s69, 1
        %s207 = scalar_lea.sflag [#allocation5], %s206
        %s208 = sand.u32 %s69, 1
        %s209 = smul.addr %s208, 2
        %s210 = scalar_lea.vmem [#allocation4], %s209
        %p211 = pneg %p82
        %p212 = pneg %p79
        %p213 = pneg %p110
        %p214 = pneg %p107
        %p215 = scmp.lt.s32.totalorder %s23, 1
        %s216 = scalar_select %p215, %s23, 1
        %p217 = scmp.lt.s32.totalorder %s24, 0
        %s218 = scalar_select %p217, %s24, 0
        %s219 = sadd.s32 %s218, %s216
        %s220 = scalar_lea.vmem %s2, %s219
        %p221 = scmp.lt.s32.totalorder %s23, 1
        %s222 = scalar_select %p221, %s23, 1
        %p223 = scmp.lt.s32.totalorder %s24, 0
        %s224 = scalar_select %p223, %s24, 0
        %s225 = sadd.s32 %s224, %s222
        %s226 = scalar_lea.vmem %s2, %s225
        %v227 = vld [vmem:[%s183] sm:$0x3]
        %s228 = scalar_lea.vmem %s183, 2 [#allocation2]
        %v229 = vld [vmem:[%s228] sm:$0x3]
        %s230 = scalar_lea.vmem %s183, 4 [#allocation2]
        %v231 = vld [vmem:[%s230] sm:$0x3]
        %s232 = scalar_lea.vmem %s183, 6 [#allocation2]
        %v233 = vld [vmem:[%s232] sm:$0x3]
        %v234 = vld [vmem:[%s193] sm:$0x3]
        %v235 = vmax.f32 %v227, %v229
        %v236 = vmax.f32 %v235, %v231
        %v237 = vmax.f32 %v236, %v233
        %v238 = vsub.f32 %v227, %v237
        %v239 = vmul.f32 %v238, 1.442695
        %v240 = vpow.pop %v239
        %v241 = vsub.f32 %v229, %v237
        %v242 = vmul.f32 %v241, 1.442695
        %v243 = vpow.pop %v242
        %v244 = vadd.f32 %v240, %v243
        %v245 = vsub.f32 %v231, %v237
        %v246 = vmul.f32 %v245, 1.442695
        %v247 = vpow.pop %v246
        %v248 = vadd.f32 %v244, %v247
        %v249 = vsub.f32 %v233, %v237
        %v250 = vmul.f32 %v249, 1.442695
        %v251 = vpow.pop %v250
        %v252 = vadd.f32 %v248, %v251
        %v253 = vlog2.pop %v252
        %v254 = vmul.f32 %v253, 0.6931472
        %v255 = vadd.f32 %v237, %v254
        %vm256 = vcmp.eq.s32.totalorder %v234, 0
        %v257 = vsel %vm256, %v227, 0.0
        %vm258 = vcmp.eq.s32.totalorder %v234, 1
        %v259 = vsel %vm258, %v229, %v257
        %vm260 = vcmp.eq.s32.totalorder %v234, 2
        %v261 = vsel %vm260, %v231, %v259
        %vm262 = vcmp.eq.s32.totalorder %v234, 3
        %v263 = vsel %vm262, %v233, %v261
        %v264 = vsub.f32 %v255, %v263
        %vm265 = vcmask 1041408
        %v266 = vsel %vm265, %v264, 0.0
        %267 = vadd.xlane.f32.xlu0 %v266
        %v268 = vpop.xlane.xlu0 %267
        %v269 = vrot.slane %v268, 4
        %v270 = vadd.f32 %v268, %v269
        %v271 = vrot.slane %v270, 2
        %v272 = vadd.f32 %v270, %v271
        %v273 = vrot.slane %v272, 1
        %v274 = vadd.f32 %v272, %v273
        %s275 = vtos %v274
        %v276 = vstv %s275
        %vm277 = vcmask 0
        %278 = vst.msk [vmem:[%s226] sm:$0x1] %vm277, %v276
        %p279 = scmp.lt.s32.totalorder %s23, 1
        %s280 = scalar_select %p279, %s23, 1
        %p281 = scmp.lt.s32.totalorder %s24, 0
        %s282 = scalar_select %p281, %s24, 0
        %s283 = sadd.s32 %s282, %s280
        %s284 = scalar_lea.vmem %s2, %s283
        // Predicated region
        $region37: #{tpu_custom_call.1} parent=27 // pred_check
          %p285 = pneg %p107
        $region38: #{tpu_custom_call.1} parent=27 // pred_check_branch
          %287 = sbr.rel (%p285) target = $region40
        $region39: #{tpu_custom_call.1} parent=27 // pred_region
          _
        $region40: #{tpu_custom_call.1} parent=27 // pred_fallthru
          _
      $region28: #{tpu_custom_call.1} parent=5 // pred_fallthru
        _
      %p288 = scmp.le.s32.totalorder 2, %s14
      // Predicated region
      $region41: #{tpu_custom_call.1} parent=5 // pred_check
        %p289 = pneg %p288
      $region42: #{tpu_custom_call.1} parent=5 // pred_check_branch
        %291 = sbr.rel (%p289) target = $region44
      $region43: #{tpu_custom_call.1} parent=5 // pred_region
        %s292 = ssub.s32 %s14, 2
        // Predicated region
        $region45: #{tpu_custom_call.1} parent=43 // pred_check
          %p293 = pneg %p113
        $region46: #{tpu_custom_call.1} parent=43 // pred_check_branch
          %295 = sbr.rel (%p293) target = $region48
        $region47: #{tpu_custom_call.1} parent=43 // pred_region
          %p296 = scmp.lt.s32.totalorder %s25, 1
          %s297 = scalar_select %p296, %s25, 1
          %p298 = scmp.lt.s32.totalorder %s26, 0
          %s299 = scalar_select %p298, %s26, 0
          %s300 = sadd.s32 %s299, %s297
          %s301 = scalar_lea.vmem %s2, %s300
        $region48: #{tpu_custom_call.1} parent=43 // pred_fallthru
          _
      $region44: #{tpu_custom_call.1} parent=5 // pred_fallthru
        _
    $region6: #{tpu_custom_call.1} parent=1 // loop_footer
      %s18 = sadd.s32 1, %s14
    $region7: #{tpu_custom_call.1} parent=1 // loop_footer_branch
      %13 = sbr.rel target = $region3
    $region8: #{tpu_custom_call.1} parent=1 // loop_exit
      _
    %302 = vsyncpa [#allocation3], 1
    %s303 = scalar_lea.sflag [#allocation3], 1
    %304 = vsyncpa %s303, 1
    %305 = vsyncpa [#allocation5], 1
    %s306 = scalar_lea.sflag [#allocation5], 1
    %307 = vsyncpa %s306, 1

</llo_original>
